<compile_context>
chip_gen: v7x
topology: tpu7x:2x2x1
jax: 0.10.0
libtpu: 0.0.40
codegen_flags: <defaults>
</compile_context>

<pallas_src>
import math

import jax
import jax.numpy as jnp
from jax.experimental import pallas as pl
from jax.experimental.pallas import tpu as pltpu


_VMEM_LIMIT_BYTES = 64 * 1024 * 1024  # > 32 MiB scoped default; fine on v5e/v6e/v7x


# ---------------------------------------------------------------------------
# fc1 kernel:  o = x @ w + b
# ---------------------------------------------------------------------------

def _linear_kernel(x_ref, w_ref, b_ref, o_ref):
    acc = jnp.dot(x_ref[...], w_ref[...], preferred_element_type=jnp.float32)
    o_ref[...] = (acc + b_ref[...].astype(jnp.float32)).astype(o_ref.dtype)


def linear(x2d, w, b, *, tm=256):
    """x2d: (M, K), w: (K, N), b: (N,) -> (M, N)."""
    M, K = x2d.shape
    N = w.shape[1]
    tm = min(tm, M)
    pad = (-M) % tm
    if pad:  # ragged tail: pad rows, slice off below (no hard assert)
        x2d = jnp.pad(x2d, ((0, pad), (0, 0)))
    Mp = M + pad
    out = pl.pallas_call(
        _linear_kernel,
        out_shape=jax.ShapeDtypeStruct((Mp, N), x2d.dtype),
        grid=(Mp // tm,),
        in_specs=[
            pl.BlockSpec((tm, K), lambda i: (i, 0)),
            # Weight / bias are fully resident (constant index_map).  They could
            # additionally be single-buffered (pipeline_mode=pl.Buffered(1)) to
            # halve their VMEM footprint for very large hidden sizes.
            pl.BlockSpec((K, N), lambda i: (0, 0)),
            pl.BlockSpec((1, N), lambda i: (0, 0)),
        ],
        out_specs=pl.BlockSpec((tm, N), lambda i: (i, 0)),
        compiler_params=pltpu.CompilerParams(
            dimension_semantics=("parallel",),
            vmem_limit_bytes=_VMEM_LIMIT_BYTES),
    )(x2d, w, b.reshape(1, N))
    return out[:M] if pad else out


# ---------------------------------------------------------------------------
# Fused depthwise 3x3 conv (pad=1) + exact GELU + fc2
# ---------------------------------------------------------------------------

def _dwconv_gelu_fc2_kernel(h_ref, wdw_ref, bdw_ref, w2_ref, b2_ref, o_ref,
                            pad_ref, acc_ref):
    # h_ref  : (1, H, W, tc)   hidden activation (one batch elem, channel slice)
    # wdw_ref: (9, tc)         depthwise taps, k = dy*3 + dx
    # bdw_ref: (1, tc)
    # w2_ref : (tc, Cout)      fc2 weight slice (channel axis is the reduction)
    # b2_ref : (1, Cout)
    # o_ref  : (1, HW, Cout)   same block across the channel grid axis (accumulator)
    # pad_ref: VMEM (H+2, W+2, tc) f32 scratch: in-kernel zero-padded halo
    # acc_ref: VMEM (HW, Cout) f32 scratch: fc2 accumulator
    c = pl.program_id(1)
    nc = pl.num_programs(1)
    _, H, W, tc = h_ref.shape
    HW = H * W

    @pl.when(c == 0)
    def _():
        acc_ref[...] = jnp.zeros_like(acc_ref)

    # Zero-padded halo built in VMEM (no wrapper-side jnp.pad -> no extra HBM
    # pass over the hidden tensor).
    pad_ref[...] = jnp.zeros_like(pad_ref)
    pad_ref[1:H + 1, 1:W + 1, :] = h_ref[0].astype(jnp.float32)

    wdw = wdw_ref[...].astype(jnp.float32)
    conv = jnp.zeros((H, W, tc), jnp.float32)
    # Only 3 sublane-shifted loads (dx); the dy shift is a free outer-dim slice.
    for dx in range(3):
        xs = pad_ref[:, dx:dx + W, :]                 # (H+2, W, tc)
        for dy in range(3):
            conv = conv + xs[dy:dy + H] * wdw[dy * 3 + dx]
    conv = conv + bdw_ref[...].astype(jnp.float32)

    # Exact erf GELU, matching torch.nn.GELU() default numerics.
    act = jax.nn.gelu(conv, approximate=False)

    a2 = act.reshape(HW, tc).astype(w2_ref.dtype)
    acc_ref[...] += jnp.dot(a2, w2_ref[...], preferred_element_type=jnp.float32)

    @pl.when(c == nc - 1)
    def _():
        o_ref[0] = (acc_ref[...] + b2_ref[...].astype(jnp.float32)).astype(o_ref.dtype)


def _pick_channel_tile(ch, max_tc=512):
    for tc in (512, 384, 256, 128):
        if tc <= max_tc and ch % tc == 0:
            return tc
    return ch  # small / non-128-multiple hidden: keep all channels resident


def dwconv_gelu_fc2(h_bnc, wdw, bdw, w2, b2, H, W, *, max_tc=512):
    """hidden (B, N, Ch) -> depthwise3x3(pad=1) + GELU + fc2 -> (B, N, Cout)."""
    B, N, Ch = h_bnc.shape
    assert N == H * W
    Cout = w2.shape[1]
    tc = _pick_channel_tile(Ch, max_tc)
    nct = Ch // tc
    # (B, N, C) row-major is exactly NHWC -> free reshape, no data movement.
    h = h_bnc.reshape(B, H, W, Ch)
    # TODO(synk): for very large H*W also tile over rows (with a 1-row halo) so
    # the per-step image tile and the (HW, Cout) accumulator stay under v7x VMEM.
    return pl.pallas_call(
        _dwconv_gelu_fc2_kernel,
        out_shape=jax.ShapeDtypeStruct((B, N, Cout), h_bnc.dtype),
        grid=(B, nct),
        in_specs=[
            pl.BlockSpec((1, H, W, tc), lambda b, c: (b, 0, 0, c)),
            pl.BlockSpec((9, tc), lambda b, c: (0, c)),
            pl.BlockSpec((1, tc), lambda b, c: (0, c)),
            pl.BlockSpec((tc, Cout), lambda b, c: (c, 0)),
            pl.BlockSpec((1, Cout), lambda b, c: (0, 0)),
        ],
        out_specs=pl.BlockSpec((1, N, Cout), lambda b, c: (b, 0, 0)),
        scratch_shapes=[
            pltpu.VMEM((H + 2, W + 2, tc), jnp.float32),
            pltpu.VMEM((N, Cout), jnp.float32),
        ],
        compiler_params=pltpu.CompilerParams(
            dimension_semantics=("parallel", "arbitrary"),
            vmem_limit_bytes=_VMEM_LIMIT_BYTES),
    )(h, wdw, bdw.reshape(1, Ch), w2, b2.reshape(1, Cout))


# ---------------------------------------------------------------------------
# Full forward:  Mlp.forward(x, H, W)
# ---------------------------------------------------------------------------

def mlp_forward(params, x, H, W):
    """x: (B, N, C_in) with N == H*W."""
    B, N, Cin = x.shape
    h = linear(x.reshape(B * N, Cin), params["w1"], params["b1"])
    Ch = h.shape[-1]
    h = h.reshape(B, N, Ch)
    # dropout: p=0.0 in the reference default -> identity, omitted.
    return dwconv_gelu_fc2(h, params["wdw"], params["bdw"],
                           params["w2"], params["b2"], H, W)


# ---------------------------------------------------------------------------
# Parameter init (mirrors Mlp._init_weights statistics) and pure-JAX reference
# ---------------------------------------------------------------------------

def init_params(key, in_features, hidden_features, out_features,
                dtype=jnp.float32):
    k1, k2, k3 = jax.random.split(key, 3)
    # nn.Linear: trunc_normal_(std=0.02), bias zero. Stored as (in, out).
    w1 = 0.02 * jax.random.truncated_normal(
        k1, -2.0, 2.0, (in_features, hidden_features), jnp.float32)
    b1 = jnp.zeros((hidden_features,), jnp.float32)
    w2 = 0.02 * jax.random.truncated_normal(
        k2, -2.0, 2.0, (hidden_features, out_features), jnp.float32)
    b2 = jnp.zeros((out_features,), jnp.float32)
    # depthwise Conv2d(dim, dim, 3, groups=dim): normal(0, sqrt(2/9)), bias 0.
    wdw = (math.sqrt(2.0 / 9.0)
           * jax.random.normal(k3, (3, 3, hidden_features), jnp.float32))
    wdw = wdw.reshape(9, hidden_features)
    bdw = jnp.zeros((hidden_features,), jnp.float32)
    p = {"w1": w1, "b1": b1, "w2": w2, "b2": b2, "wdw": wdw, "bdw": bdw}
    return {k: v.astype(dtype) for k, v in p.items()}


def mlp_reference(params, x, H, W):
    B, N, _ = x.shape
    h = x @ params["w1"] + params["b1"]
    Ch = h.shape[-1]
    hi = h.reshape(B, H, W, Ch)
    hp = jnp.pad(hi, ((0, 0), (1, 1), (1, 1), (0, 0)))
    w = params["wdw"].reshape(3, 3, Ch)
    conv = jnp.zeros_like(hi)
    for dy in range(3):
        for dx in range(3):
            conv = conv + hp[:, dy:dy + H, dx:dx + W, :] * w[dy, dx]
    conv = conv + params["bdw"]
    act = jax.nn.gelu(conv, approximate=False).reshape(B, N, Ch)
    return act @ params["w2"] + params["b2"]


# ---------------------------------------------------------------------------

if __name__ == "__main__":
    B, H, W = 2, 8, 8
    N = H * W
    in_features, hidden_features, out_features = 64, 128, 64

    key = jax.random.PRNGKey(0)
    kp, kx = jax.random.split(key)

    # f32 run (matches the PyTorch module numerics) + correctness check.
    params = init_params(kp, in_features, hidden_features, out_features)
    x = jax.random.normal(kx, (B, N, in_features), jnp.float32)
    out = jax.block_until_ready(mlp_forward(params, x, H, W))
    assert out.shape == (B, N, out_features)
    ref = mlp_reference(params, x, H, W)
    assert jnp.max(jnp.abs(out - ref)) < 1e-2, "mismatch vs reference"

    # bf16 storage / MXU-native path smoke run (f32 accumulation inside).
    params_bf16 = {k: v.astype(jnp.bfloat16) for k, v in params.items()}
    out_bf16 = jax.block_until_ready(
        mlp_forward(params_bf16, x.astype(jnp.bfloat16), H, W))
    assert out_bf16.shape == (B, N, out_features)

    print("KERNEL_OK")
</pallas_src>

<mosaic_0001>
module attributes {stable_mosaic.version = 11 : i64} {
  func.func @_linear_kernel(%arg0: i32, %arg1: memref<128x64xf32, #tpu.memory_space<vmem>>, %arg2: memref<64x128xf32, #tpu.memory_space<vmem>>, %arg3: memref<1x128xf32, #tpu.memory_space<vmem>>, %arg4: memref<128x128xf32, #tpu.memory_space<vmem>>) attributes {dimension_semantics = [#tpu.dimension_semantics<parallel>], iteration_bounds = array<i64: 1>, scalar_prefetch = 0 : i64, scratch_operands = 0 : i64, tpu.core_type = #tpu.core_type<tc>, window_params = [{transform_indices = @transform_0, window_bounds = array<i64: 128, 64>}, {pipeline_mode = #tpu.pipeline_mode<synchronous>, transform_indices = @transform_1, window_bounds = array<i64: 64, 128>}, {pipeline_mode = #tpu.pipeline_mode<synchronous>, transform_indices = @transform_2, window_bounds = array<i64: 1, 128>}, {transform_indices = @transform_3, window_bounds = array<i64: 128, 128>}]} {
    %c0 = arith.constant 0 : index
    %c0_0 = arith.constant 0 : index
    %0 = vector.load %arg1[%c0, %c0_0] : memref<128x64xf32, #tpu.memory_space<vmem>>, vector<128x64xf32>
    %c0_1 = arith.constant 0 : index
    %c0_2 = arith.constant 0 : index
    %1 = vector.load %arg2[%c0_1, %c0_2] : memref<64x128xf32, #tpu.memory_space<vmem>>, vector<64x128xf32>
    %cst = arith.constant dense<0.000000e+00> : vector<128x128xf32>
    %2 = tpu.matmul %0, %1, %cst {dimension_numbers = #tpu.dot_dimension_numbers<[1], [0], [0], [1], [0, 0, 1, 1], [], []>} : vector<128x64xf32>, vector<64x128xf32>, vector<128x128xf32> -> vector<128x128xf32>
    %c0_3 = arith.constant 0 : index
    %c0_4 = arith.constant 0 : index
    %3 = vector.load %arg3[%c0_3, %c0_4] : memref<1x128xf32, #tpu.memory_space<vmem>>, vector<1x128xf32>
    %4 = vector.broadcast %3 : vector<1x128xf32> to vector<128x128xf32>
    %5 = arith.addf %2, %4 : vector<128x128xf32>
    %c0_5 = arith.constant 0 : index
    %c0_6 = arith.constant 0 : index
    %6 = vector.load %arg4[%c0_5, %c0_6] : memref<128x128xf32, #tpu.memory_space<vmem>>, vector<128x128xf32>
    tpu.vector_store %arg4[%c0_5, %c0_6], %5 {strides = array<i32>} : memref<128x128xf32, #tpu.memory_space<vmem>>, vector<128x128xf32>,
    return
  }
  func.func @transform_0(%arg0: i32) -> (i32, i32) {
    %c0_i32 = arith.constant 0 : i32
    %c0_i32_0 = arith.constant 0 : i32
    return %arg0, %c0_i32 : i32, i32
  }
  func.func @transform_1(%arg0: i32) -> (i32, i32) {
    %c0_i32 = arith.constant 0 : i32
    %c0_i32_0 = arith.constant 0 : i32
    %c0_i32_1 = arith.constant 0 : i32
    return %c0_i32, %c0_i32_0 : i32, i32
  }
  func.func @transform_2(%arg0: i32) -> (i32, i32) {
    %c0_i32 = arith.constant 0 : i32
    %c0_i32_0 = arith.constant 0 : i32
    %c0_i32_1 = arith.constant 0 : i32
    return %c0_i32, %c0_i32_0 : i32, i32
  }
  func.func @transform_3(%arg0: i32) -> (i32, i32) {
    %c0_i32 = arith.constant 0 : i32
    %c0_i32_0 = arith.constant 0 : i32
    return %arg0, %c0_i32 : i32, i32
  }
}

</mosaic_0001>

<llo_original>
// kernel: tpu_custom_call.1
$region0: #{tpu_custom_call.1}
  #allocation0 [shape = 'u32[]', space=smem, size = 0x4, offset = 0x4, fixed_abs, tag = 'smem constant byte address 0x4 - core index']
  #allocation1 [shape = 'u32[144,128]{1,0:T(1,128)}', space=vmem, size = 0x12000, scoped, tag = 'internal scratch']
  %s0 = inlined_call_operand.hbm [shape: f32[128,64], index: 0, kind: input, shape index: {}]
  %s1 = inlined_call_operand.hbm [shape: f32[64,128], index: 1, kind: input, shape index: {}]
  %s2 = inlined_call_operand.hbm [shape: f32[1,128], index: 2, kind: input, shape index: {}]
  %s3 = inlined_call_operand.hbm [shape: f32[128,128], index: 3, kind: output, shape index: {}]
  %s4 = sld [smem:[#allocation0]]
  $region34: #{tpu_custom_call.1} parent=0
    _
  %s6 = ssub.s32 1, %s4
  %s7 = scalar_select 0, %s6, %s4
  $region1: #{tpu_custom_call.1} parent=0
    #allocation2 [shape = 'u8[65536]{0}', space=vmem, size = 0x10000, scoped, tag = 'input window, operand 0, single buffered']
    #allocation3 [shape = 's32[1]{0}', space=sflag, size = 0x4, scoped, tag = 'scoped memory for tpu_custom_call.1']
    #allocation4 [shape = 's32[1]{0}', space=sflag, size = 0x4, scoped, tag = 'scoped memory for tpu_custom_call.1']
    #allocation5 [shape = 'u8[32768]{0}', space=vmem, size = 0x8000, scoped, tag = 'input window, operand 1, single buffered']
    #allocation6 [shape = 's32[1]{0}', space=sflag, size = 0x4, scoped, tag = 'scoped memory for tpu_custom_call.1']
    #allocation7 [shape = 'u8[512]{0}', space=vmem, size = 0x400, scoped, tag = 'input window, operand 2, single buffered']
    #allocation8 [shape = 'u8[65536]{0}', space=vmem, size = 0x10000, scoped, tag = 'output window, operand 0, single buffered']
    %8 = vsyncpa [#allocation3], 0
    %9 = vsyncpa [#allocation6], 0
    %10 = vsyncpa [#allocation4], 0
    // Predicated region
    $region2: #{tpu_custom_call.1} parent=1 // pred_check
      _
    $region3: #{tpu_custom_call.1} parent=1 // pred_check_branch
      %12 = sbr.rel (0) target = $region5
    $region4: #{tpu_custom_call.1} parent=1 // pred_region
      %s14 = ssub.s32 2048, 2048
      %15 = vsyncadd [#allocation3], %s14
      %s16 = sshll.u32 [#allocation2], 4
      %s17 = int_to_ptr.vmem [resolvable:$true] %s16
      %22 = dma.hbm_to_vmem [thread:$0]  %s0, 2048, %s17, [#allocation3], 128, 128, 8
    $region5: #{tpu_custom_call.1} parent=1 // pred_fallthru
      _
    // Predicated region
    $region6: #{tpu_custom_call.1} parent=1 // pred_check
      _
    $region7: #{tpu_custom_call.1} parent=1 // pred_check_branch
      %24 = sbr.rel (0) target = $region9
    $region8: #{tpu_custom_call.1} parent=1 // pred_region
      %s26 = ssub.s32 1024, 1024
      %27 = vsyncadd [#allocation6], %s26
      %s28 = sshll.u32 [#allocation5], 4
      %s29 = int_to_ptr.vmem [resolvable:$true] %s28
      %34 = dma.hbm_to_vmem [thread:$0]  %s1, 1024, %s29, [#allocation6], 128, 128, 8
    $region9: #{tpu_custom_call.1} parent=1 // pred_fallthru
      _
    // Predicated region
    $region10: #{tpu_custom_call.1} parent=1 // pred_check
      _
    $region11: #{tpu_custom_call.1} parent=1 // pred_check_branch
      %36 = sbr.rel (0) target = $region13
    $region12: #{tpu_custom_call.1} parent=1 // pred_region
      %s38 = ssub.s32 16, 16
      %39 = vsyncadd [#allocation6], %s38
      %s41 = sshll.u32 [#allocation7], 4
      %s42 = int_to_ptr.vmem [resolvable:$true] %s41
      %44 = dma.hbm_to_vmem [thread:$0]  %s2, 16, %s42, [#allocation6]
    $region13: #{tpu_custom_call.1} parent=1 // pred_fallthru
      _
    // Predicated region
    $region14: #{tpu_custom_call.1} parent=1 // pred_check
      _
    $region15: #{tpu_custom_call.1} parent=1 // pred_check_branch
      %46 = sbr.rel (0) target = $region17
    $region16: #{tpu_custom_call.1} parent=1 // pred_region
      %47 = dma.done [#allocation3], 2048
    $region17: #{tpu_custom_call.1} parent=1 // pred_fallthru
      _
    // Predicated region
    $region18: #{tpu_custom_call.1} parent=1 // pred_check
      _
    $region19: #{tpu_custom_call.1} parent=1 // pred_check_branch
      %49 = sbr.rel (0) target = $region21
    $region20: #{tpu_custom_call.1} parent=1 // pred_region
      %50 = dma.done [#allocation6], 1024
    $region21: #{tpu_custom_call.1} parent=1 // pred_fallthru
      _
    // Predicated region
    $region22: #{tpu_custom_call.1} parent=1 // pred_check
      _
    $region23: #{tpu_custom_call.1} parent=1 // pred_check_branch
      %52 = sbr.rel (0) target = $region25
    $region24: #{tpu_custom_call.1} parent=1 // pred_region
      %53 = dma.done [#allocation6], 16
    $region25: #{tpu_custom_call.1} parent=1 // pred_fallthru
      _
    %v54 = vld [vmem:[#allocation2] sm:$0xff]
    %v55 = vld [vmem:[#allocation2 + $0x8] sm:$0xff]
    %v56 = vld [vmem:[#allocation2 + $0x10] sm:$0xff]
    %v57 = vld [vmem:[#allocation2 + $0x18] sm:$0xff]
    %v58 = vld [vmem:[#allocation2 + $0x20] sm:$0xff]
    %v59 = vld [vmem:[#allocation2 + $0x28] sm:$0xff]
    %v60 = vld [vmem:[#allocation2 + $0x30] sm:$0xff]
    %v61 = vld [vmem:[#allocation2 + $0x38] sm:$0xff]
    %v62 = vld [vmem:[#allocation2 + $0x40] sm:$0xff]
    %v63 = vld [vmem:[#allocation2 + $0x48] sm:$0xff]
    %v64 = vld [vmem:[#allocation2 + $0x50] sm:$0xff]
    %v65 = vld [vmem:[#allocation2 + $0x58] sm:$0xff]
    %v66 = vld [vmem:[#allocation2 + $0x60] sm:$0xff]
    %v67 = vld [vmem:[#allocation2 + $0x68] sm:$0xff]
    %v68 = vld [vmem:[#allocation2 + $0x70] sm:$0xff]
    %v69 = vld [vmem:[#allocation2 + $0x78] sm:$0xff]
    %v70 = vld [vmem:[#allocation5] sm:$0xff]
    %v71 = vld [vmem:[#allocation5 + $0x8] sm:$0xff]
    %v72 = vld [vmem:[#allocation5 + $0x10] sm:$0xff]
    %v73 = vld [vmem:[#allocation5 + $0x18] sm:$0xff]
    %v74 = vld [vmem:[#allocation5 + $0x20] sm:$0xff]
    %v75 = vld [vmem:[#allocation5 + $0x28] sm:$0xff]
    %v76 = vld [vmem:[#allocation5 + $0x30] sm:$0xff]
    %v77 = vld [vmem:[#allocation5 + $0x38] sm:$0xff]
    %v78 = vld [vmem:[#allocation7] sm:$0x1]
    %v80 = vlaneseq
    %v81 = vshrl.u32 %v80, 7
    %v82 = vsub.s32 0, %v81
    %v83 = vrot.slane %v78, %v82
    %vm85 = vcmask 523264
    %v87 = vsel %vm85, %v54, 0
    %v90 = vsel %vm85, %v55, 0
    %v93 = vsel %vm85, %v56, 0
    %v96 = vsel %vm85, %v57, 0
    %v99 = vsel %vm85, %v58, 0
    %v102 = vsel %vm85, %v59, 0
    %v105 = vsel %vm85, %v60, 0
    %v108 = vsel %vm85, %v61, 0
    %v111 = vsel %vm85, %v62, 0
    %v114 = vsel %vm85, %v63, 0
    %v117 = vsel %vm85, %v64, 0
    %v120 = vsel %vm85, %v65, 0
    %v123 = vsel %vm85, %v66, 0
    %v126 = vsel %vm85, %v67, 0
    %v129 = vsel %vm85, %v68, 0
    %v132 = vsel %vm85, %v69, 0
    %134 = vmatprep.subr.mxu0 0.0
    %135 = vmatpush1.msra.mxu0 %v70
    %136 = vmatprep.subr.mxu0 0.0
    %137 = vmatpush1.msra.mxu0 %v71
    %138 = vmatprep.subr.mxu0 0.0
    %139 = vmatpush1.msra.mxu0 %v72
    %140 = vmatprep.subr.mxu0 0.0
    %141 = vmatpush1.msra.mxu0 %v73
    %142 = vmatprep.subr.mxu0 0.0
    %143 = vmatpush1.msra.mxu0 %v74
    %144 = vmatprep.subr.mxu0 0.0
    %145 = vmatpush1.msra.mxu0 %v75
    %146 = vmatprep.subr.mxu0 0.0
    %147 = vmatpush1.msra.mxu0 %v76
    %148 = vmatprep.subr.mxu0 0.0
    %149 = vmatpush1.msra.mxu0 %v77
    %150 = vmatprep.subr.mxu0 0.0
    %151 = vmatpush1.msra.mxu0 0.0
    %152 = vmatprep.subr.mxu0 0.0
    %153 = vmatpush1.msra.mxu0 0.0
    %154 = vmatprep.subr.mxu0 0.0
    %155 = vmatpush1.msra.mxu0 0.0
    %156 = vmatprep.subr.mxu0 0.0
    %157 = vmatpush1.msra.mxu0 0.0
    %158 = vmatprep.subr.mxu0 0.0
    %159 = vmatpush1.msra.mxu0 0.0
    %160 = vmatprep.subr.mxu0 0.0
    %161 = vmatpush1.msra.mxu0 0.0
    %162 = vmatprep.subr.mxu0 0.0
    %163 = vmatpush1.msra.mxu0 0.0
    %164 = vmatprep.subr.mxu0 0.0
    %165 = vmatpush1.msra.mxu0 0.0
    %166 = vmatprep.subr.mxu0 0.0
    %167 = vmatpush1.msra.mxu0 0.0
    %168 = vmatprep.subr.mxu0 0.0
    %169 = vmatpush1.msra.mxu0 0.0
    %170 = vmatprep.subr.mxu0 0.0
    %171 = vmatpush1.msra.mxu0 0.0
    %172 = vmatprep.subr.mxu0 0.0
    %173 = vmatpush1.msra.mxu0 0.0
    %174 = vmatprep.subr.mxu0 0.0
    %175 = vmatpush1.msra.mxu0 0.0
    %176 = vmatprep.subr.mxu0 0.0
    %177 = vmatpush1.msra.mxu0 0.0
    %178 = vmatprep.subr.mxu0 0.0
    %179 = vmatpush1.msra.mxu0 0.0
    %180 = vmatprep.subr.mxu0 0.0
    %181 = vmatpush1.msra.mxu0 0.0
    %182 = vmatprep.subr.mxu0 0.0
    %183 = vmatpush1.msra.mxu0 0.0
    %184 = vmatprep.subr.mxu0 0.0
    %185 = vmatpush1.msra.mxu0 0.0
    %186 = vmatprep.subr.mxu0 0.0
    %187 = vmatpush1.msra.mxu0 0.0
    %188 = vmatprep.subr.mxu0 0.0
    %189 = vmatpush1.msra.mxu0 0.0
    %190 = vmatprep.subr.mxu0 0.0
    %191 = vmatpush1.msra.mxu0 0.0
    %192 = vmatprep.subr.mxu0 0.0
    %193 = vmatpush1.msra.mxu0 0.0
    %194 = vmatprep.subr.mxu0 0.0
    %195 = vmatpush1.msra.mxu0 0.0
    %196 = vmatprep.subr.mxu0 0.0
    %197 = vmatpush1.msra.mxu0 0.0
    %198 = vmatprep.mubr.f32.mxu0 0.0
    %199 = vmatmul.mubr.f32.gmra.mrb[0].mxu0 %v87
    %v200 = vpop.f32.mrb[0].mxu0
    %v201 = vadd.f32 %v83, %v200
    %v202 = vpop.f32.mrb[0].mxu0
    %203 = vmatprep.mubr.f32.mxu0 0.0
    %204 = vmatmul.mubr.f32.gmra.mrb[0].mxu0 %v90
    %v205 = vpop.f32.mrb[0].mxu0
    %v206 = vadd.f32 %v83, %v205
    %v207 = vpop.f32.mrb[0].mxu0
    %208 = vmatprep.mubr.f32.mxu0 0.0
    %209 = vmatmul.mubr.f32.gmra.mrb[0].mxu0 %v93
    %v210 = vpop.f32.mrb[0].mxu0
    %v211 = vadd.f32 %v83, %v210
    %v212 = vpop.f32.mrb[0].mxu0
    %213 = vmatprep.mubr.f32.mxu0 0.0
    %214 = vmatmul.mubr.f32.gmra.mrb[0].mxu0 %v96
    %v215 = vpop.f32.mrb[0].mxu0
    %v216 = vadd.f32 %v83, %v215
    %v217 = vpop.f32.mrb[0].mxu0
    %218 = vmatprep.mubr.f32.mxu0 0.0
    %219 = vmatmul.mubr.f32.gmra.mrb[0].mxu0 %v99
    %v220 = vpop.f32.mrb[0].mxu0
    %v221 = vadd.f32 %v83, %v220
    %v222 = vpop.f32.mrb[0].mxu0
    %223 = vmatprep.mubr.f32.mxu0 0.0
    %224 = vmatmul.mubr.f32.gmra.mrb[0].mxu0 %v102
    %v225 = vpop.f32.mrb[0].mxu0
    %v226 = vadd.f32 %v83, %v225
    %v227 = vpop.f32.mrb[0].mxu0
    %228 = vmatprep.mubr.f32.mxu0 0.0
    %229 = vmatmul.mubr.f32.gmra.mrb[0].mxu0 %v105
    %v230 = vpop.f32.mrb[0].mxu0
    %v231 = vadd.f32 %v83, %v230
    %v232 = vpop.f32.mrb[0].mxu0
    %233 = vmatprep.mubr.f32.mxu0 0.0
    %234 = vmatmul.mubr.f32.gmra.mrb[0].mxu0 %v108
    %v235 = vpop.f32.mrb[0].mxu0
    %v236 = vadd.f32 %v83, %v235
    %v237 = vpop.f32.mrb[0].mxu0
    %238 = vmatprep.mubr.f32.mxu0 0.0
    %239 = vmatmul.mubr.f32.gmra.mrb[0].mxu0 %v111
    %v240 = vpop.f32.mrb[0].mxu0
    %v241 = vadd.f32 %v83, %v240
    %v242 = vpop.f32.mrb[0].mxu0
    %243 = vmatprep.mubr.f32.mxu0 0.0
    %244 = vmatmul.mubr.f32.gmra.mrb[0].mxu0 %v114
    %v245 = vpop.f32.mrb[0].mxu0
    %v246 = vadd.f32 %v83, %v245
    %v247 = vpop.f32.mrb[0].mxu0
    %248 = vmatprep.mubr.f32.mxu0 0.0
    %249 = vmatmul.mubr.f32.gmra.mrb[0].mxu0 %v117
    %v250 = vpop.f32.mrb[0].mxu0
    %v251 = vadd.f32 %v83, %v250
    %v252 = vpop.f32.mrb[0].mxu0
    %253 = vmatprep.mubr.f32.mxu0 0.0
    %254 = vmatmul.mubr.f32.gmra.mrb[0].mxu0 %v120
    %v255 = vpop.f32.mrb[0].mxu0
    %v256 = vadd.f32 %v83, %v255
    %v257 = vpop.f32.mrb[0].mxu0
    %258 = vmatprep.mubr.f32.mxu0 0.0
    %259 = vmatmul.mubr.f32.gmra.mrb[0].mxu0 %v123
    %v260 = vpop.f32.mrb[0].mxu0
    %v261 = vadd.f32 %v83, %v260
    %v262 = vpop.f32.mrb[0].mxu0
    %263 = vmatprep.mubr.f32.mxu0 0.0
    %264 = vmatmul.mubr.f32.gmra.mrb[0].mxu0 %v126
    %v265 = vpop.f32.mrb[0].mxu0
    %v266 = vadd.f32 %v83, %v265
    %v267 = vpop.f32.mrb[0].mxu0
    %268 = vmatprep.mubr.f32.mxu0 0.0
    %269 = vmatmul.mubr.f32.gmra.mrb[0].mxu0 %v129
    %v270 = vpop.f32.mrb[0].mxu0
    %v271 = vadd.f32 %v83, %v270
    %v272 = vpop.f32.mrb[0].mxu0
    %273 = vmatprep.mubr.f32.mxu0 0.0
    %274 = vmatmul.mubr.f32.gmra.mrb[0].mxu0 %v132
    %v275 = vpop.f32.mrb[0].mxu0
    %v276 = vadd.f32 %v83, %v275
    %v277 = vpop.f32.mrb[0].mxu0
    %278 = vdwg.mxu0
    %279 = vst [vmem:[#allocation8] sm:$0xff] %v201
    %280 = vst [vmem:[#allocation8 + $0x8] sm:$0xff] %v206
    %281 = vst [vmem:[#allocation8 + $0x10] sm:$0xff] %v211
    %282 = vst [vmem:[#allocation8 + $0x18] sm:$0xff] %v216
    %283 = vst [vmem:[#allocation8 + $0x20] sm:$0xff] %v221
    %284 = vst [vmem:[#allocation8 + $0x28] sm:$0xff] %v226
    %285 = vst [vmem:[#allocation8 + $0x30] sm:$0xff] %v231
    %286 = vst [vmem:[#allocation8 + $0x38] sm:$0xff] %v236
    %287 = vst [vmem:[#allocation8 + $0x40] sm:$0xff] %v241
    %288 = vst [vmem:[#allocation8 + $0x48] sm:$0xff] %v246
    %289 = vst [vmem:[#allocation8 + $0x50] sm:$0xff] %v251
    %290 = vst [vmem:[#allocation8 + $0x58] sm:$0xff] %v256
    %291 = vst [vmem:[#allocation8 + $0x60] sm:$0xff] %v261
    %292 = vst [vmem:[#allocation8 + $0x68] sm:$0xff] %v266
    %293 = vst [vmem:[#allocation8 + $0x70] sm:$0xff] %v271
    %294 = vst [vmem:[#allocation8 + $0x78] sm:$0xff] %v276
    // Predicated region
    $region26: #{tpu_custom_call.1} parent=1 // pred_check
      _
    $region27: #{tpu_custom_call.1} parent=1 // pred_check_branch
      %296 = sbr.rel (0) target = $region29
    $region28: #{tpu_custom_call.1} parent=1 // pred_region
      %s298 = ssub.s32 2048, 2048
      %299 = vsyncadd [#allocation4], %s298
      %s300 = sshll.u32 [#allocation8], 4
      %s301 = int_to_ptr.vmem [resolvable:$true] %s300
      %306 = dma.vmem_to_hbm [thread:$0]  %s301, 2048, %s3, [#allocation4], 128, 128, 8
    $region29: #{tpu_custom_call.1} parent=1 // pred_fallthru
      _
    // Predicated region
    $region30: #{tpu_custom_call.1} parent=1 // pred_check
      _
    $region31: #{tpu_custom_call.1} parent=1 // pred_check_branch
      %308 = sbr.rel (0) target = $region33
    $region32: #{tpu_custom_call.1} parent=1 // pred_region
      %309 = dma.done [#allocation4], 2048
    $region33: #{tpu_custom_call.1} parent=1 // pred_fallthru
      _
    %310 = vsyncpa [#allocation3], 1
    %311 = vsyncpa [#allocation6], 1
    %312 = vsyncpa [#allocation4], 1

</llo_original>
